<compile_context>
chip_gen: v7x
topology: tpu7x:2x2x1
jax: 0.10.0
libtpu: 0.0.40
codegen_flags: <defaults>
</compile_context>

<pallas_src>
import functools

import jax
import jax.numpy as jnp
from jax.experimental import pallas as pl
from jax.experimental.pallas import tpu as pltpu

_LANE = 128
_SUBLANE = 8


def _round_up(x, m):
    return (x + m - 1) // m * m


def _actor_kernel(s_ref, p_ref, o_ref, *, lim, negative_slope,
                  s_pad, h_pad, h2_pad, a_pad):
    # s_ref: (tile_b, s_pad) f32 state tile
    # p_ref: (rows, slab_w) f32 packed parameter slab (resident across steps)
    # o_ref: (tile_b, a_pad) f32 lane-dense output tile
    x = s_ref[...]

    # Static (8-row / 128-lane aligned) section offsets inside the slab.
    r_w1 = 0
    r_b1 = s_pad
    r_w2 = r_b1 + _SUBLANE
    r_b2 = r_w2 + h_pad
    r_w3 = r_b2 + _SUBLANE
    r_b3 = r_w3 + h2_pad

    # linear1 + leaky_relu
    h = jnp.dot(x, p_ref[r_w1:r_w1 + s_pad, 0:h_pad],
                preferred_element_type=jnp.float32)
    h = h + p_ref[r_b1:r_b1 + 1, 0:h_pad]
    h = jnp.where(h >= 0, h, negative_slope * h)

    # linear2 + leaky_relu
    h = jnp.dot(h, p_ref[r_w2:r_w2 + h_pad, 0:h2_pad],
                preferred_element_type=jnp.float32)
    h = h + p_ref[r_b2:r_b2 + 1, 0:h2_pad]
    h = jnp.where(h >= 0, h, negative_slope * h)

    # linear3 + tanh, scaled by the action limit
    a = jnp.dot(h, p_ref[r_w3:r_w3 + h2_pad, 0:a_pad],
                preferred_element_type=jnp.float32)
    a = a + p_ref[r_b3:r_b3 + 1, 0:a_pad]
    o_ref[...] = jnp.tanh(a) * lim


def _pick_batch_tile(batch):
    """Choose the batch tile first; the batch is then padded up to it."""
    b8 = _round_up(max(int(batch), 1), _SUBLANE)
    tile = min(2048, pl.next_power_of_2(b8))
    tile = max(tile, _SUBLANE)
    # Keep >= 2 grid steps when the batch allows it so the "parallel" axis
    # shards across both v7x TensorCores (neutral on single-TC v5e/v6e).
    if tile > _SUBLANE and pl.cdiv(b8, tile) < 2:
        tile //= 2
    return tile


def pack_actor_params(w1, b1, w2, b2, w3, b3):
    """Pack weights/biases into one f32 slab with per-layer lane padding.

    Weights are (in, out).  Each section starts on an 8-row boundary and each
    layer's output dim is padded to its own 128-lane multiple, so static
    kernel slices never cross a (8,128) tile edge and narrow layers don't
    inflate to the widest layer's width.
    """
    S, H = w1.shape
    H2 = w2.shape[1]
    A = w3.shape[1]
    s_pad = _round_up(S, _SUBLANE)
    h_pad = _round_up(H, _LANE)
    h2_pad = _round_up(H2, _LANE)
    a_pad = _round_up(A, _LANE)
    slab_w = max(h_pad, h2_pad, a_pad)
    rows = s_pad + _SUBLANE + h_pad + _SUBLANE + h2_pad + _SUBLANE

    slab = jnp.zeros((rows, slab_w), jnp.float32)
    slab = slab.at[0:S, 0:H].set(jnp.asarray(w1, jnp.float32))
    r_b1 = s_pad
    slab = slab.at[r_b1, 0:H].set(jnp.asarray(b1, jnp.float32).reshape(-1))
    r_w2 = r_b1 + _SUBLANE
    slab = slab.at[r_w2:r_w2 + H, 0:H2].set(jnp.asarray(w2, jnp.float32))
    r_b2 = r_w2 + h_pad
    slab = slab.at[r_b2, 0:H2].set(jnp.asarray(b2, jnp.float32).reshape(-1))
    r_w3 = r_b2 + _SUBLANE
    slab = slab.at[r_w3:r_w3 + H2, 0:A].set(jnp.asarray(w3, jnp.float32))
    r_b3 = r_w3 + h2_pad
    slab = slab.at[r_b3, 0:A].set(jnp.asarray(b3, jnp.float32).reshape(-1))

    return {"slab": slab, "s_pad": s_pad, "h_pad": h_pad, "h2_pad": h2_pad,
            "a_pad": a_pad, "state_size": S, "action_size": A}


def actor_forward(state, packed, lim, *, negative_slope=0.01,
                  return_padded=False):
    """Fused Actor forward pass as a single batched Pallas TPU kernel.

    state:  (B, stateSize) array (any float dtype; cast to f32)
    packed: output of pack_actor_params()
    return_padded: if True, return the raw (B_pad, a_pad) kernel output so a
        training caller can skip the extra XLA slice pass.
    """
    slab = packed["slab"]
    S = packed["state_size"]
    A = packed["action_size"]
    s_pad = packed["s_pad"]
    h_pad = packed["h_pad"]
    h2_pad = packed["h2_pad"]
    a_pad = packed["a_pad"]
    rows, slab_w = slab.shape

    state = jnp.asarray(state, jnp.float32)
    B = state.shape[0]
    tile_b = _pick_batch_tile(B)
    B_pad = _round_up(max(B, 1), tile_b)
    grid = B_pad // tile_b

    # Zero-pad batch (to the tile) and state features (to the 8-row boundary).
    # Zero padding is exact: leaky_relu(0)=0, tanh(0)=0, padded rows/lanes are
    # sliced off (or ignored by the caller when return_padded=True).
    if (B_pad, s_pad) != (B, S):
        x = jnp.zeros((B_pad, s_pad), jnp.float32).at[:B, :S].set(state)
    else:
        x = state

    kernel = functools.partial(
        _actor_kernel, lim=float(lim), negative_slope=float(negative_slope),
        s_pad=s_pad, h_pad=h_pad, h2_pad=h2_pad, a_pad=a_pad)

    flops = 2 * B_pad * (s_pad * h_pad + h_pad * h2_pad + h2_pad * a_pad)
    bytes_accessed = 4 * (B_pad * s_pad + rows * slab_w + B_pad * a_pad)
    cost = pl.CostEstimate(flops=flops,
                           transcendentals=B_pad * a_pad,
                           bytes_accessed=bytes_accessed)

    def run(single_buffer_slab):
        if single_buffer_slab:
            # Constant index_map -> slab is never re-fetched; one buffer is
            # enough.  Halves the slab's VMEM footprint (matters on v7x when
            # hiddenSize scales up).
            slab_spec = pl.BlockSpec((rows, slab_w), lambda i: (0, 0),
                                     pipeline_mode=pl.Buffered(1))
        else:
            slab_spec = pl.BlockSpec((rows, slab_w), lambda i: (0, 0))
        return pl.pallas_call(
            kernel,
            out_shape=jax.ShapeDtypeStruct((B_pad, a_pad), jnp.float32),
            grid=(grid,),
            in_specs=[
                pl.BlockSpec((tile_b, s_pad), lambda i: (i, 0)),
                slab_spec,
            ],
            out_specs=pl.BlockSpec((tile_b, a_pad), lambda i: (i, 0)),
            compiler_params=pltpu.CompilerParams(
                dimension_semantics=("parallel",)),
            cost_estimate=cost,
        )(x, slab)

    try:
        out = run(True)
    except Exception:
        # Fallback if this jax version rejects single-buffered pipeline_mode.
        out = run(False)

    if return_padded:
        return out
    return out[:B, :A]


def init_actor_params(key, state_size, hidden_size, action_size):
    """Init mimicking nn.Linear's U(-1/sqrt(fan_in), +1/sqrt(fan_in))."""
    def linear(k, fan_in, fan_out):
        kw, kb = jax.random.split(k)
        bound = 1.0 / jnp.sqrt(jnp.float32(fan_in))
        w = jax.random.uniform(kw, (fan_in, fan_out), jnp.float32, -bound, bound)
        b = jax.random.uniform(kb, (1, fan_out), jnp.float32, -bound, bound)
        return w, b

    k1, k2, k3 = jax.random.split(key, 3)
    w1, b1 = linear(k1, state_size, hidden_size)
    w2, b2 = linear(k2, hidden_size, hidden_size // 2)
    w3, b3 = linear(k3, hidden_size // 2, action_size)
    params = {"w1": w1, "b1": b1, "w2": w2, "b2": b2, "w3": w3, "b3": b3}
    params["packed"] = pack_actor_params(w1, b1, w2, b2, w3, b3)
    return params


def actor_forward_ref(state, params, lim, *, negative_slope=0.01):
    """Pure-JAX reference for correctness checking."""
    state = jnp.asarray(state, jnp.float32)
    h = state @ params["w1"] + params["b1"]
    h = jnp.where(h >= 0, h, negative_slope * h)
    h = h @ params["w2"] + params["b2"]
    h = jnp.where(h >= 0, h, negative_slope * h)
    a = jnp.tanh(h @ params["w3"] + params["b3"])
    return a * lim


if __name__ == "__main__":
    # Small shapes implied by the module: stateSize=8, hiddenSize=32, actionSize=4.
    state_size, hidden_size, action_size = 8, 32, 4
    lim = 2.0

    key = jax.random.PRNGKey(0)
    k_params, k_small, k_big, k_awk = jax.random.split(key, 4)
    params = init_actor_params(k_params, state_size, hidden_size, action_size)

    # 1) tiny inference-style batch (B=2 -> one 8-row tile)
    s_small = jax.random.normal(k_small, (2, state_size), jnp.float32)
    out_small = jax.block_until_ready(actor_forward(s_small, params["packed"], lim))
    ref_small = actor_forward_ref(s_small, params, lim)
    assert out_small.shape == (2, action_size)
    assert jnp.allclose(out_small, ref_small, atol=1e-5, rtol=1e-5)

    # 2) training-style minibatch: tile_b=128 -> 2 parallel grid steps
    #    (both v7x TensorCores busy).
    s_big = jax.random.normal(k_big, (256, state_size), jnp.float32)
    out_big = jax.block_until_ready(actor_forward(s_big, params["packed"], lim))
    ref_big = actor_forward_ref(s_big, params, lim)
    assert out_big.shape == (256, action_size)
    assert jnp.allclose(out_big, ref_big, atol=1e-5, rtol=1e-5)

    # 3) awkward batch size (previously degraded to 33 eight-row grid steps;
    #    now tile_b=256, padded to 512 rows, 2 grid steps).
    s_awk = jax.random.normal(k_awk, (264, state_size), jnp.float32)
    out_awk = jax.block_until_ready(actor_forward(s_awk, params["packed"], lim))
    ref_awk = actor_forward_ref(s_awk, params, lim)
    assert out_awk.shape == (264, action_size)
    assert jnp.allclose(out_awk, ref_awk, atol=1e-5, rtol=1e-5)

    print("KERNEL_OK")
</pallas_src>

<mosaic_0001>
module attributes {stable_mosaic.version = 11 : i64} {
  func.func @_actor_kernel(%arg0: i32, %arg1: memref<8x8xf32, #tpu.memory_space<vmem>>, %arg2: memref<288x128xf32, #tpu.memory_space<vmem>>, %arg3: memref<8x128xf32, #tpu.memory_space<vmem>>) attributes {dimension_semantics = [#tpu.dimension_semantics<parallel>], iteration_bounds = array<i64: 1>, scalar_prefetch = 0 : i64, scratch_operands = 0 : i64, tpu.core_type = #tpu.core_type<tc>, window_params = [{transform_indices = @transform_0, window_bounds = array<i64: 8, 8>}, {pipeline_mode = #tpu.pipeline_mode<synchronous>, transform_indices = @transform_1, window_bounds = array<i64: 288, 128>}, {transform_indices = @transform_2, window_bounds = array<i64: 8, 128>}]} {
    %c0 = arith.constant 0 : index
    %c0_0 = arith.constant 0 : index
    %0 = vector.load %arg1[%c0, %c0_0] : memref<8x8xf32, #tpu.memory_space<vmem>>, vector<8x8xf32>
    %c0_1 = arith.constant 0 : index
    %c0_2 = arith.constant 0 : index
    %1 = vector.load %arg2[%c0_1, %c0_2] : memref<288x128xf32, #tpu.memory_space<vmem>>, vector<8x128xf32>
    %cst = arith.constant dense<0.000000e+00> : vector<8x128xf32>
    %2 = tpu.matmul %0, %1, %cst {dimension_numbers = #tpu.dot_dimension_numbers<[1], [0], [0], [1], [0, 0, 1, 1], [], []>} : vector<8x8xf32>, vector<8x128xf32>, vector<8x128xf32> -> vector<8x128xf32>
    %c8 = arith.constant 8 : index
    %c0_3 = arith.constant 0 : index
    %3 = vector.load %arg2[%c8, %c0_3] : memref<288x128xf32, #tpu.memory_space<vmem>>, vector<1x128xf32>
    %4 = vector.broadcast %3 : vector<1x128xf32> to vector<8x128xf32>
    %5 = arith.addf %2, %4 : vector<8x128xf32>
    %cst_4 = arith.constant 0.000000e+00 : f32
    %6 = vector.broadcast %cst_4 : f32 to vector<8x128xf32>
    %7 = arith.cmpf oge, %5, %6 : vector<8x128xf32>
    %cst_5 = arith.constant 0.00999999977 : f32
    %8 = vector.broadcast %cst_5 : f32 to vector<8x128xf32>
    %9 = arith.mulf %8, %5 : vector<8x128xf32>
    %10 = arith.select %7, %5, %9 : vector<8x128xi1>, vector<8x128xf32>
    %c16 = arith.constant 16 : index
    %c0_6 = arith.constant 0 : index
    %11 = vector.load %arg2[%c16, %c0_6] : memref<288x128xf32, #tpu.memory_space<vmem>>, vector<128x128xf32>
    %cst_7 = arith.constant dense<0.000000e+00> : vector<8x128xf32>
    %12 = tpu.matmul %10, %11, %cst_7 {dimension_numbers = #tpu.dot_dimension_numbers<[1], [0], [0], [1], [0, 0, 1, 1], [], []>} : vector<8x128xf32>, vector<128x128xf32>, vector<8x128xf32> -> vector<8x128xf32>
    %c144 = arith.constant 144 : index
    %c0_8 = arith.constant 0 : index
    %13 = vector.load %arg2[%c144, %c0_8] : memref<288x128xf32, #tpu.memory_space<vmem>>, vector<1x128xf32>
    %14 = vector.broadcast %13 : vector<1x128xf32> to vector<8x128xf32>
    %15 = arith.addf %12, %14 : vector<8x128xf32>
    %cst_9 = arith.constant 0.000000e+00 : f32
    %16 = vector.broadcast %cst_9 : f32 to vector<8x128xf32>
    %17 = arith.cmpf oge, %15, %16 : vector<8x128xf32>
    %cst_10 = arith.constant 0.00999999977 : f32
    %18 = vector.broadcast %cst_10 : f32 to vector<8x128xf32>
    %19 = arith.mulf %18, %15 : vector<8x128xf32>
    %20 = arith.select %17, %15, %19 : vector<8x128xi1>, vector<8x128xf32>
    %c152 = arith.constant 152 : index
    %c0_11 = arith.constant 0 : index
    %21 = vector.load %arg2[%c152, %c0_11] : memref<288x128xf32, #tpu.memory_space<vmem>>, vector<128x128xf32>
    %cst_12 = arith.constant dense<0.000000e+00> : vector<8x128xf32>
    %22 = tpu.matmul %20, %21, %cst_12 {dimension_numbers = #tpu.dot_dimension_numbers<[1], [0], [0], [1], [0, 0, 1, 1], [], []>} : vector<8x128xf32>, vector<128x128xf32>, vector<8x128xf32> -> vector<8x128xf32>
    %c280 = arith.constant 280 : index
    %c0_13 = arith.constant 0 : index
    %23 = vector.load %arg2[%c280, %c0_13] : memref<288x128xf32, #tpu.memory_space<vmem>>, vector<1x128xf32>
    %24 = vector.broadcast %23 : vector<1x128xf32> to vector<8x128xf32>
    %25 = arith.addf %22, %24 : vector<8x128xf32>
    %26 = math.tanh %25 : vector<8x128xf32>
    %cst_14 = arith.constant 2.000000e+00 : f32
    %27 = vector.broadcast %cst_14 : f32 to vector<8x128xf32>
    %28 = arith.mulf %26, %27 : vector<8x128xf32>
    %c0_15 = arith.constant 0 : index
    %c0_16 = arith.constant 0 : index
    %29 = vector.load %arg3[%c0_15, %c0_16] : memref<8x128xf32, #tpu.memory_space<vmem>>, vector<8x128xf32>
    tpu.vector_store %arg3[%c0_15, %c0_16], %28 {strides = array<i32>} : memref<8x128xf32, #tpu.memory_space<vmem>>, vector<8x128xf32>,
    return
  }
  func.func @transform_0(%arg0: i32) -> (i32, i32) {
    %c0_i32 = arith.constant 0 : i32
    %c0_i32_0 = arith.constant 0 : i32
    return %arg0, %c0_i32 : i32, i32
  }
  func.func @transform_1(%arg0: i32) -> (i32, i32) {
    %c0_i32 = arith.constant 0 : i32
    %c0_i32_0 = arith.constant 0 : i32
    %c0_i32_1 = arith.constant 0 : i32
    return %c0_i32, %c0_i32_0 : i32, i32
  }
  func.func @transform_2(%arg0: i32) -> (i32, i32) {
    %c0_i32 = arith.constant 0 : i32
    %c0_i32_0 = arith.constant 0 : i32
    return %arg0, %c0_i32 : i32, i32
  }
}

module attributes {stable_mosaic.version = 11 : i64} {
  func.func @_actor_kernel(%arg0: i32, %arg1: memref<8x8xf32, #tpu.memory_space<vmem>>, %arg2: memref<288x128xf32, #tpu.memory_space<vmem>>, %arg3: memref<8x128xf32, #tpu.memory_space<vmem>>) attributes {dimension_semantics = [#tpu.dimension_semantics<parallel>], iteration_bounds = array<i64: 1>, scalar_prefetch = 0 : i64, scratch_operands = 0 : i64, tpu.core_type = #tpu.core_type<tc>, window_params = [{transform_indices = @transform_0, window_bounds = array<i64: 8, 8>}, {pipeline_mode = #tpu.pipeline_mode<synchronous>, transform_indices = @transform_1, window_bounds = array<i64: 288, 128>}, {transform_indices = @transform_2, window_bounds = array<i64: 8, 128>}]} {
    %c0 = arith.constant 0 : index
    %c0_0 = arith.constant 0 : index
    %0 = vector.load %arg1[%c0, %c0_0] : memref<8x8xf32, #tpu.memory_space<vmem>>, vector<8x8xf32>
    %c0_1 = arith.constant 0 : index
    %c0_2 = arith.constant 0 : index
    %1 = vector.load %arg2[%c0_1, %c0_2] : memref<288x128xf32, #tpu.memory_space<vmem>>, vector<8x128xf32>
    %cst = arith.constant dense<0.000000e+00> : vector<8x128xf32>
    %2 = tpu.matmul %0, %1, %cst {dimension_numbers = #tpu.dot_dimension_numbers<[1], [0], [0], [1], [0, 0, 1, 1], [], []>} : vector<8x8xf32>, vector<8x128xf32>, vector<8x128xf32> -> vector<8x128xf32>
    %c8 = arith.constant 8 : index
    %c0_3 = arith.constant 0 : index
    %3 = vector.load %arg2[%c8, %c0_3] : memref<288x128xf32, #tpu.memory_space<vmem>>, vector<1x128xf32>
    %4 = vector.broadcast %3 : vector<1x128xf32> to vector<8x128xf32>
    %5 = arith.addf %2, %4 : vector<8x128xf32>
    %cst_4 = arith.constant 0.000000e+00 : f32
    %6 = vector.broadcast %cst_4 : f32 to vector<8x128xf32>
    %7 = arith.cmpf oge, %5, %6 : vector<8x128xf32>
    %cst_5 = arith.constant 0.00999999977 : f32
    %8 = vector.broadcast %cst_5 : f32 to vector<8x128xf32>
    %9 = arith.mulf %8, %5 : vector<8x128xf32>
    %10 = arith.select %7, %5, %9 : vector<8x128xi1>, vector<8x128xf32>
    %c16 = arith.constant 16 : index
    %c0_6 = arith.constant 0 : index
    %11 = vector.load %arg2[%c16, %c0_6] : memref<288x128xf32, #tpu.memory_space<vmem>>, vector<128x128xf32>
    %cst_7 = arith.constant dense<0.000000e+00> : vector<8x128xf32>
    %12 = tpu.matmul %10, %11, %cst_7 {dimension_numbers = #tpu.dot_dimension_numbers<[1], [0], [0], [1], [0, 0, 1, 1], [], []>} : vector<8x128xf32>, vector<128x128xf32>, vector<8x128xf32> -> vector<8x128xf32>
    %c144 = arith.constant 144 : index
    %c0_8 = arith.constant 0 : index
    %13 = vector.load %arg2[%c144, %c0_8] : memref<288x128xf32, #tpu.memory_space<vmem>>, vector<1x128xf32>
    %14 = vector.broadcast %13 : vector<1x128xf32> to vector<8x128xf32>
    %15 = arith.addf %12, %14 : vector<8x128xf32>
    %cst_9 = arith.constant 0.000000e+00 : f32
    %16 = vector.broadcast %cst_9 : f32 to vector<8x128xf32>
    %17 = arith.cmpf oge, %15, %16 : vector<8x128xf32>
    %cst_10 = arith.constant 0.00999999977 : f32
    %18 = vector.broadcast %cst_10 : f32 to vector<8x128xf32>
    %19 = arith.mulf %18, %15 : vector<8x128xf32>
    %20 = arith.select %17, %15, %19 : vector<8x128xi1>, vector<8x128xf32>
    %c152 = arith.constant 152 : index
    %c0_11 = arith.constant 0 : index
    %21 = vector.load %arg2[%c152, %c0_11] : memref<288x128xf32, #tpu.memory_space<vmem>>, vector<128x128xf32>
    %cst_12 = arith.constant dense<0.000000e+00> : vector<8x128xf32>
    %22 = tpu.matmul %20, %21, %cst_12 {dimension_numbers = #tpu.dot_dimension_numbers<[1], [0], [0], [1], [0, 0, 1, 1], [], []>} : vector<8x128xf32>, vector<128x128xf32>, vector<8x128xf32> -> vector<8x128xf32>
    %c280 = arith.constant 280 : index
    %c0_13 = arith.constant 0 : index
    %23 = vector.load %arg2[%c280, %c0_13] : memref<288x128xf32, #tpu.memory_space<vmem>>, vector<1x128xf32>
    %24 = vector.broadcast %23 : vector<1x128xf32> to vector<8x128xf32>
    %25 = arith.addf %22, %24 : vector<8x128xf32>
    %26 = math.tanh %25 : vector<8x128xf32>
    %cst_14 = arith.constant 2.000000e+00 : f32
    %27 = vector.broadcast %cst_14 : f32 to vector<8x128xf32>
    %28 = arith.mulf %26, %27 : vector<8x128xf32>
    %c0_15 = arith.constant 0 : index
    %c0_16 = arith.constant 0 : index
    %29 = vector.load %arg3[%c0_15, %c0_16] : memref<8x128xf32, #tpu.memory_space<vmem>>, vector<8x128xf32>
    tpu.vector_store %arg3[%c0_15, %c0_16], %28 {strides = array<i32>} : memref<8x128xf32, #tpu.memory_space<vmem>>, vector<8x128xf32>,
    return
  }
  func.func @transform_0(%arg0: i32) -> (i32, i32) {
    %c0_i32 = arith.constant 0 : i32
    %c0_i32_0 = arith.constant 0 : i32
    return %arg0, %c0_i32 : i32, i32
  }
  func.func @transform_1(%arg0: i32) -> (i32, i32) {
    %c0_i32 = arith.constant 0 : i32
    %c0_i32_0 = arith.constant 0 : i32
    %c0_i32_1 = arith.constant 0 : i32
    return %c0_i32, %c0_i32_0 : i32, i32
  }
  func.func @transform_2(%arg0: i32) -> (i32, i32) {
    %c0_i32 = arith.constant 0 : i32
    %c0_i32_0 = arith.constant 0 : i32
    return %arg0, %c0_i32 : i32, i32
  }
}

</mosaic_0001>

<llo_original>
// kernel: tpu_custom_call.1
$region0: #{tpu_custom_call.1}
  #allocation0 [shape = 'u32[]', space=smem, size = 0x4, offset = 0x4, fixed_abs, tag = 'smem constant byte address 0x4 - core index']
  #allocation1 [shape = 'u32[144,128]{1,0:T(1,128)}', space=vmem, size = 0x12000, scoped, tag = 'internal scratch']
  %s0 = inlined_call_operand.hbm [shape: f32[8,8], index: 0, kind: input, shape index: {}]
  %s1 = inlined_call_operand.hbm [shape: f32[288,128], index: 1, kind: input, shape index: {}]
  %s2 = inlined_call_operand.hbm [shape: f32[8,128], index: 2, kind: output, shape index: {}]
  %s3 = sld [smem:[#allocation0]]
  $region26: #{tpu_custom_call.1} parent=0
    _
  %s5 = ssub.s32 1, %s3
  %s6 = scalar_select 0, %s5, %s3
  $region1: #{tpu_custom_call.1} parent=0
    #allocation2 [shape = 'u8[4096]{0}', space=vmem, size = 0x1000, scoped, tag = 'input window, operand 0, single buffered']
    #allocation3 [shape = 's32[1]{0}', space=sflag, size = 0x4, scoped, tag = 'scoped memory for tpu_custom_call.1']
    #allocation4 [shape = 's32[1]{0}', space=sflag, size = 0x4, scoped, tag = 'scoped memory for tpu_custom_call.1']
    #allocation5 [shape = 'u8[147456]{0}', space=vmem, size = 0x24000, scoped, tag = 'input window, operand 1, single buffered']
    #allocation6 [shape = 's32[1]{0}', space=sflag, size = 0x4, scoped, tag = 'scoped memory for tpu_custom_call.1']
    #allocation7 [shape = 'u8[4096]{0}', space=vmem, size = 0x1000, scoped, tag = 'output window, operand 0, single buffered']
    %7 = vsyncpa [#allocation3], 0
    %8 = vsyncpa [#allocation6], 0
    %9 = vsyncpa [#allocation4], 0
    // Predicated region
    $region2: #{tpu_custom_call.1} parent=1 // pred_check
      _
    $region3: #{tpu_custom_call.1} parent=1 // pred_check_branch
      %11 = sbr.rel (0) target = $region5
    $region4: #{tpu_custom_call.1} parent=1 // pred_region
      %s13 = ssub.s32 128, 128
      %14 = vsyncadd [#allocation3], %s13
      %s16 = sshll.u32 [#allocation2], 4
      %s17 = int_to_ptr.vmem [resolvable:$true] %s16
      %19 = dma.hbm_to_vmem [thread:$0]  %s0, 128, %s17, [#allocation3]
    $region5: #{tpu_custom_call.1} parent=1 // pred_fallthru
      _
    // Predicated region
    $region6: #{tpu_custom_call.1} parent=1 // pred_check
      _
    $region7: #{tpu_custom_call.1} parent=1 // pred_check_branch
      %21 = sbr.rel (0) target = $region9
    $region8: #{tpu_custom_call.1} parent=1 // pred_region
      %s23 = ssub.s32 4608, 4608
      %24 = vsyncadd [#allocation6], %s23
      %s25 = sshll.u32 [#allocation5], 4
      %s26 = int_to_ptr.vmem [resolvable:$true] %s25
      %31 = dma.hbm_to_vmem [thread:$0]  %s1, 4608, %s26, [#allocation6], 128, 128, 8
    $region9: #{tpu_custom_call.1} parent=1 // pred_fallthru
      _
    // Predicated region
    $region10: #{tpu_custom_call.1} parent=1 // pred_check
      _
    $region11: #{tpu_custom_call.1} parent=1 // pred_check_branch
      %33 = sbr.rel (0) target = $region13
    $region12: #{tpu_custom_call.1} parent=1 // pred_region
      %34 = dma.done [#allocation3], 128
    $region13: #{tpu_custom_call.1} parent=1 // pred_fallthru
      _
    // Predicated region
    $region14: #{tpu_custom_call.1} parent=1 // pred_check
      _
    $region15: #{tpu_custom_call.1} parent=1 // pred_check_branch
      %36 = sbr.rel (0) target = $region17
    $region16: #{tpu_custom_call.1} parent=1 // pred_region
      %37 = dma.done [#allocation6], 4608
    $region17: #{tpu_custom_call.1} parent=1 // pred_fallthru
      _
    %v38 = vld [vmem:[#allocation2] sm:$0xff]
    %v39 = vld [vmem:[#allocation5] sm:$0xff]
    %v40 = vld [vmem:[#allocation5 + $0x8] sm:$0x1]
    %v41 = vlaneseq
    %v42 = vshrl.u32 %v41, 7
    %v43 = vsub.s32 0, %v42
    %v44 = vrot.slane %v40, %v43
    %vm45 = vcmask 64512
    %v47 = vsel %vm45, %v38, 0
    %49 = vmatprep.subr.mxu0 0.0
    %50 = vmatpush1.msra.mxu0 %v39
    %51 = vmatprep.subr.mxu0 0.0
    %52 = vmatpush1.msra.mxu0 0.0
    %53 = vmatprep.subr.mxu0 0.0
    %54 = vmatpush1.msra.mxu0 0.0
    %55 = vmatprep.subr.mxu0 0.0
    %56 = vmatpush1.msra.mxu0 0.0
    %57 = vmatprep.subr.mxu0 0.0
    %58 = vmatpush1.msra.mxu0 0.0
    %59 = vmatprep.subr.mxu0 0.0
    %60 = vmatpush1.msra.mxu0 0.0
    %61 = vmatprep.subr.mxu0 0.0
    %62 = vmatpush1.msra.mxu0 0.0
    %63 = vmatprep.subr.mxu0 0.0
    %64 = vmatpush1.msra.mxu0 0.0
    %65 = vmatprep.subr.mxu0 0.0
    %66 = vmatpush1.msra.mxu0 0.0
    %67 = vmatprep.subr.mxu0 0.0
    %68 = vmatpush1.msra.mxu0 0.0
    %69 = vmatprep.subr.mxu0 0.0
    %70 = vmatpush1.msra.mxu0 0.0
    %71 = vmatprep.subr.mxu0 0.0
    %72 = vmatpush1.msra.mxu0 0.0
    %73 = vmatprep.subr.mxu0 0.0
    %74 = vmatpush1.msra.mxu0 0.0
    %75 = vmatprep.subr.mxu0 0.0
    %76 = vmatpush1.msra.mxu0 0.0
    %77 = vmatprep.subr.mxu0 0.0
    %78 = vmatpush1.msra.mxu0 0.0
    %79 = vmatprep.subr.mxu0 0.0
    %80 = vmatpush1.msra.mxu0 0.0
    %81 = vmatprep.subr.mxu0 0.0
    %82 = vmatpush1.msra.mxu0 0.0
    %83 = vmatprep.subr.mxu0 0.0
    %84 = vmatpush1.msra.mxu0 0.0
    %85 = vmatprep.subr.mxu0 0.0
    %86 = vmatpush1.msra.mxu0 0.0
    %87 = vmatprep.subr.mxu0 0.0
    %88 = vmatpush1.msra.mxu0 0.0
    %89 = vmatprep.subr.mxu0 0.0
    %90 = vmatpush1.msra.mxu0 0.0
    %91 = vmatprep.subr.mxu0 0.0
    %92 = vmatpush1.msra.mxu0 0.0
    %93 = vmatprep.subr.mxu0 0.0
    %94 = vmatpush1.msra.mxu0 0.0
    %95 = vmatprep.subr.mxu0 0.0
    %96 = vmatpush1.msra.mxu0 0.0
    %97 = vmatprep.subr.mxu0 0.0
    %98 = vmatpush1.msra.mxu0 0.0
    %99 = vmatprep.subr.mxu0 0.0
    %100 = vmatpush1.msra.mxu0 0.0
    %101 = vmatprep.subr.mxu0 0.0
    %102 = vmatpush1.msra.mxu0 0.0
    %103 = vmatprep.subr.mxu0 0.0
    %104 = vmatpush1.msra.mxu0 0.0
    %105 = vmatprep.subr.mxu0 0.0
    %106 = vmatpush1.msra.mxu0 0.0
    %107 = vmatprep.subr.mxu0 0.0
    %108 = vmatpush1.msra.mxu0 0.0
    %109 = vmatprep.subr.mxu0 0.0
    %110 = vmatpush1.msra.mxu0 0.0
    %111 = vmatprep.subr.mxu0 0.0
    %112 = vmatpush1.msra.mxu0 0.0
    %113 = vmatprep.mubr.f32.mxu0 0.0
    %114 = vmatmul.mubr.f32.gmra.mrb[0].mxu0 %v47
    %v115 = vpop.f32.mrb[0].mxu0
    %v116 = vadd.f32 %v44, %v115
    %v117 = vpop.f32.mrb[0].mxu0
    %118 = vdwg.mxu0
    %vm119 = vcmp.ge.f32.partialorder %v116, 0.0
    %v120 = vmul.f32 %v116, 0.01
    %v121 = vsel %vm119, %v116, %v120
    %v122 = vld [vmem:[#allocation5 + $0x10] sm:$0xff]
    %v123 = vld [vmem:[#allocation5 + $0x18] sm:$0xff]
    %v124 = vld [vmem:[#allocation5 + $0x20] sm:$0xff]
    %v125 = vld [vmem:[#allocation5 + $0x28] sm:$0xff]
    %v126 = vld [vmem:[#allocation5 + $0x30] sm:$0xff]
    %v127 = vld [vmem:[#allocation5 + $0x38] sm:$0xff]
    %v128 = vld [vmem:[#allocation5 + $0x40] sm:$0xff]
    %v129 = vld [vmem:[#allocation5 + $0x48] sm:$0xff]
    %v130 = vld [vmem:[#allocation5 + $0x50] sm:$0xff]
    %v131 = vld [vmem:[#allocation5 + $0x58] sm:$0xff]
    %v132 = vld [vmem:[#allocation5 + $0x60] sm:$0xff]
    %v133 = vld [vmem:[#allocation5 + $0x68] sm:$0xff]
    %v134 = vld [vmem:[#allocation5 + $0x70] sm:$0xff]
    %v135 = vld [vmem:[#allocation5 + $0x78] sm:$0xff]
    %v136 = vld [vmem:[#allocation5 + $0x80] sm:$0xff]
    %v137 = vld [vmem:[#allocation5 + $0x88] sm:$0xff]
    %v138 = vld [vmem:[#allocation5 + $0x90] sm:$0x1]
    %v139 = vlaneseq
    %v140 = vshrl.u32 %v139, 7
    %v141 = vsub.s32 0, %v140
    %v142 = vrot.slane %v138, %v141
    %143 = vmatprep.subr.mxu0 0.0
    %144 = vmatpush1.msra.mxu0 %v122
    %145 = vmatprep.subr.mxu0 0.0
    %146 = vmatpush1.msra.mxu0 %v123
    %147 = vmatprep.subr.mxu0 0.0
    %148 = vmatpush1.msra.mxu0 %v124
    %149 = vmatprep.subr.mxu0 0.0
    %150 = vmatpush1.msra.mxu0 %v125
    %151 = vmatprep.subr.mxu0 0.0
    %152 = vmatpush1.msra.mxu0 %v126
    %153 = vmatprep.subr.mxu0 0.0
    %154 = vmatpush1.msra.mxu0 %v127
    %155 = vmatprep.subr.mxu0 0.0
    %156 = vmatpush1.msra.mxu0 %v128
    %157 = vmatprep.subr.mxu0 0.0
    %158 = vmatpush1.msra.mxu0 %v129
    %159 = vmatprep.subr.mxu0 0.0
    %160 = vmatpush1.msra.mxu0 %v130
    %161 = vmatprep.subr.mxu0 0.0
    %162 = vmatpush1.msra.mxu0 %v131
    %163 = vmatprep.subr.mxu0 0.0
    %164 = vmatpush1.msra.mxu0 %v132
    %165 = vmatprep.subr.mxu0 0.0
    %166 = vmatpush1.msra.mxu0 %v133
    %167 = vmatprep.subr.mxu0 0.0
    %168 = vmatpush1.msra.mxu0 %v134
    %169 = vmatprep.subr.mxu0 0.0
    %170 = vmatpush1.msra.mxu0 %v135
    %171 = vmatprep.subr.mxu0 0.0
    %172 = vmatpush1.msra.mxu0 %v136
    %173 = vmatprep.subr.mxu0 0.0
    %174 = vmatpush1.msra.mxu0 %v137
    %175 = vmatprep.subr.mxu0 0.0
    %176 = vmatpush1.msra.mxu0 0.0
    %177 = vmatprep.subr.mxu0 0.0
    %178 = vmatpush1.msra.mxu0 0.0
    %179 = vmatprep.subr.mxu0 0.0
    %180 = vmatpush1.msra.mxu0 0.0
    %181 = vmatprep.subr.mxu0 0.0
    %182 = vmatpush1.msra.mxu0 0.0
    %183 = vmatprep.subr.mxu0 0.0
    %184 = vmatpush1.msra.mxu0 0.0
    %185 = vmatprep.subr.mxu0 0.0
    %186 = vmatpush1.msra.mxu0 0.0
    %187 = vmatprep.subr.mxu0 0.0
    %188 = vmatpush1.msra.mxu0 0.0
    %189 = vmatprep.subr.mxu0 0.0
    %190 = vmatpush1.msra.mxu0 0.0
    %191 = vmatprep.subr.mxu0 0.0
    %192 = vmatpush1.msra.mxu0 0.0
    %193 = vmatprep.subr.mxu0 0.0
    %194 = vmatpush1.msra.mxu0 0.0
    %195 = vmatprep.subr.mxu0 0.0
    %196 = vmatpush1.msra.mxu0 0.0
    %197 = vmatprep.subr.mxu0 0.0
    %198 = vmatpush1.msra.mxu0 0.0
    %199 = vmatprep.subr.mxu0 0.0
    %200 = vmatpush1.msra.mxu0 0.0
    %201 = vmatprep.subr.mxu0 0.0
    %202 = vmatpush1.msra.mxu0 0.0
    %203 = vmatprep.subr.mxu0 0.0
    %204 = vmatpush1.msra.mxu0 0.0
    %205 = vmatprep.subr.mxu0 0.0
    %206 = vmatpush1.msra.mxu0 0.0
    %207 = vmatprep.mubr.f32.mxu0 0.0
    %208 = vmatmul.mubr.f32.gmra.mrb[0].mxu0 %v121
    %v209 = vpop.f32.mrb[0].mxu0
    %v210 = vadd.f32 %v142, %v209
    %v211 = vpop.f32.mrb[0].mxu0
    %212 = vdwg.mxu0
    %vm213 = vcmp.ge.f32.partialorder %v210, 0.0
    %v214 = vmul.f32 %v210, 0.01
    %v215 = vsel %vm213, %v210, %v214
    %v216 = vld [vmem:[#allocation5 + $0x98] sm:$0xff]
    %v217 = vld [vmem:[#allocation5 + $0xa0] sm:$0xff]
    %v218 = vld [vmem:[#allocation5 + $0xa8] sm:$0xff]
    %v219 = vld [vmem:[#allocation5 + $0xb0] sm:$0xff]
    %v220 = vld [vmem:[#allocation5 + $0xb8] sm:$0xff]
    %v221 = vld [vmem:[#allocation5 + $0xc0] sm:$0xff]
    %v222 = vld [vmem:[#allocation5 + $0xc8] sm:$0xff]
    %v223 = vld [vmem:[#allocation5 + $0xd0] sm:$0xff]
    %v224 = vld [vmem:[#allocation5 + $0xd8] sm:$0xff]
    %v225 = vld [vmem:[#allocation5 + $0xe0] sm:$0xff]
    %v226 = vld [vmem:[#allocation5 + $0xe8] sm:$0xff]
    %v227 = vld [vmem:[#allocation5 + $0xf0] sm:$0xff]
    %v228 = vld [vmem:[#allocation5 + $0xf8] sm:$0xff]
    %v229 = vld [vmem:[#allocation5 + $0x100] sm:$0xff]
    %v230 = vld [vmem:[#allocation5 + $0x108] sm:$0xff]
    %v231 = vld [vmem:[#allocation5 + $0x110] sm:$0xff]
    %v232 = vld [vmem:[#allocation5 + $0x118] sm:$0x1]
    %v233 = vlaneseq
    %v234 = vshrl.u32 %v233, 7
    %v235 = vsub.s32 0, %v234
    %v236 = vrot.slane %v232, %v235
    %237 = vmatprep.subr.mxu0 0.0
    %238 = vmatpush1.msra.mxu0 %v216
    %239 = vmatprep.subr.mxu0 0.0
    %240 = vmatpush1.msra.mxu0 %v217
    %241 = vmatprep.subr.mxu0 0.0
    %242 = vmatpush1.msra.mxu0 %v218
    %243 = vmatprep.subr.mxu0 0.0
    %244 = vmatpush1.msra.mxu0 %v219
    %245 = vmatprep.subr.mxu0 0.0
    %246 = vmatpush1.msra.mxu0 %v220
    %247 = vmatprep.subr.mxu0 0.0
    %248 = vmatpush1.msra.mxu0 %v221
    %249 = vmatprep.subr.mxu0 0.0
    %250 = vmatpush1.msra.mxu0 %v222
    %251 = vmatprep.subr.mxu0 0.0
    %252 = vmatpush1.msra.mxu0 %v223
    %253 = vmatprep.subr.mxu0 0.0
    %254 = vmatpush1.msra.mxu0 %v224
    %255 = vmatprep.subr.mxu0 0.0
    %256 = vmatpush1.msra.mxu0 %v225
    %257 = vmatprep.subr.mxu0 0.0
    %258 = vmatpush1.msra.mxu0 %v226
    %259 = vmatprep.subr.mxu0 0.0
    %260 = vmatpush1.msra.mxu0 %v227
    %261 = vmatprep.subr.mxu0 0.0
    %262 = vmatpush1.msra.mxu0 %v228
    %263 = vmatprep.subr.mxu0 0.0
    %264 = vmatpush1.msra.mxu0 %v229
    %265 = vmatprep.subr.mxu0 0.0
    %266 = vmatpush1.msra.mxu0 %v230
    %267 = vmatprep.subr.mxu0 0.0
    %268 = vmatpush1.msra.mxu0 %v231
    %269 = vmatprep.subr.mxu0 0.0
    %270 = vmatpush1.msra.mxu0 0.0
    %271 = vmatprep.subr.mxu0 0.0
    %272 = vmatpush1.msra.mxu0 0.0
    %273 = vmatprep.subr.mxu0 0.0
    %274 = vmatpush1.msra.mxu0 0.0
    %275 = vmatprep.subr.mxu0 0.0
    %276 = vmatpush1.msra.mxu0 0.0
    %277 = vmatprep.subr.mxu0 0.0
    %278 = vmatpush1.msra.mxu0 0.0
    %279 = vmatprep.subr.mxu0 0.0
    %280 = vmatpush1.msra.mxu0 0.0
    %281 = vmatprep.subr.mxu0 0.0
    %282 = vmatpush1.msra.mxu0 0.0
    %283 = vmatprep.subr.mxu0 0.0
    %284 = vmatpush1.msra.mxu0 0.0
    %285 = vmatprep.subr.mxu0 0.0
    %286 = vmatpush1.msra.mxu0 0.0
    %287 = vmatprep.subr.mxu0 0.0
    %288 = vmatpush1.msra.mxu0 0.0
    %289 = vmatprep.subr.mxu0 0.0
    %290 = vmatpush1.msra.mxu0 0.0
    %291 = vmatprep.subr.mxu0 0.0
    %292 = vmatpush1.msra.mxu0 0.0
    %293 = vmatprep.subr.mxu0 0.0
    %294 = vmatpush1.msra.mxu0 0.0
    %295 = vmatprep.subr.mxu0 0.0
    %296 = vmatpush1.msra.mxu0 0.0
    %297 = vmatprep.subr.mxu0 0.0
    %298 = vmatpush1.msra.mxu0 0.0
    %299 = vmatprep.subr.mxu0 0.0
    %300 = vmatpush1.msra.mxu0 0.0
    %301 = vmatprep.mubr.f32.mxu0 0.0
    %302 = vmatmul.mubr.f32.gmra.mrb[0].mxu0 %v215
    %v303 = vpop.f32.mrb[0].mxu0
    %v304 = vadd.f32 %v236, %v303
    %v305 = vpop.f32.mrb[0].mxu0
    %306 = vdwg.mxu0
    %v307 = vtanh.pop %v304
    %v308 = vmul.f32 %v307, 2.0
    %309 = vst [vmem:[#allocation7] sm:$0xff] %v308
    // Predicated region
    $region18: #{tpu_custom_call.1} parent=1 // pred_check
      _
    $region19: #{tpu_custom_call.1} parent=1 // pred_check_branch
      %311 = sbr.rel (0) target = $region21
    $region20: #{tpu_custom_call.1} parent=1 // pred_region
      %s313 = ssub.s32 128, 128
      %314 = vsyncadd [#allocation4], %s313
      %s316 = sshll.u32 [#allocation7], 4
      %s317 = int_to_ptr.vmem [resolvable:$true] %s316
      %319 = dma.vmem_to_hbm [thread:$0]  %s317, 128, %s2, [#allocation4]
    $region21: #{tpu_custom_call.1} parent=1 // pred_fallthru
      _
    // Predicated region
    $region22: #{tpu_custom_call.1} parent=1 // pred_check
      _
    $region23: #{tpu_custom_call.1} parent=1 // pred_check_branch
      %321 = sbr.rel (0) target = $region25
    $region24: #{tpu_custom_call.1} parent=1 // pred_region
      %322 = dma.done [#allocation4], 128
    $region25: #{tpu_custom_call.1} parent=1 // pred_fallthru
      _
    %323 = vsyncpa [#allocation3], 1
    %324 = vsyncpa [#allocation6], 1
    %325 = vsyncpa [#allocation4], 1

// kernel: tpu_custom_call.1
$region0: #{tpu_custom_call.1}
  #allocation0 [shape = 'u32[]', space=smem, size = 0x4, offset = 0x4, fixed_abs, tag = 'smem constant byte address 0x4 - core index']
  #allocation1 [shape = 'u32[144,128]{1,0:T(1,128)}', space=vmem, size = 0x12000, scoped, tag = 'internal scratch']
  %s0 = inlined_call_operand.hbm [shape: f32[8,8], index: 0, kind: input, shape index: {}]
  %s1 = inlined_call_operand.hbm [shape: f32[288,128], index: 1, kind: input, shape index: {}]
  %s2 = inlined_call_operand.hbm [shape: f32[8,128], index: 2, kind: output, shape index: {}]
  %s3 = sld [smem:[#allocation0]]
  $region26: #{tpu_custom_call.1} parent=0
    _
  %s5 = ssub.s32 1, %s3
  %s6 = scalar_select 0, %s5, %s3
  $region1: #{tpu_custom_call.1} parent=0
    #allocation2 [shape = 'u8[4096]{0}', space=vmem, size = 0x1000, scoped, tag = 'input window, operand 0, single buffered']
    #allocation3 [shape = 's32[1]{0}', space=sflag, size = 0x4, scoped, tag = 'scoped memory for tpu_custom_call.1']
    #allocation4 [shape = 's32[1]{0}', space=sflag, size = 0x4, scoped, tag = 'scoped memory for tpu_custom_call.1']
    #allocation5 [shape = 'u8[147456]{0}', space=vmem, size = 0x24000, scoped, tag = 'input window, operand 1, single buffered']
    #allocation6 [shape = 's32[1]{0}', space=sflag, size = 0x4, scoped, tag = 'scoped memory for tpu_custom_call.1']
    #allocation7 [shape = 'u8[4096]{0}', space=vmem, size = 0x1000, scoped, tag = 'output window, operand 0, single buffered']
    %7 = vsyncpa [#allocation3], 0
    %8 = vsyncpa [#allocation6], 0
    %9 = vsyncpa [#allocation4], 0
    // Predicated region
    $region2: #{tpu_custom_call.1} parent=1 // pred_check
      _
    $region3: #{tpu_custom_call.1} parent=1 // pred_check_branch
      %11 = sbr.rel (0) target = $region5
    $region4: #{tpu_custom_call.1} parent=1 // pred_region
      %s13 = ssub.s32 128, 128
      %14 = vsyncadd [#allocation3], %s13
      %s16 = sshll.u32 [#allocation2], 4
      %s17 = int_to_ptr.vmem [resolvable:$true] %s16
      %19 = dma.hbm_to_vmem [thread:$0]  %s0, 128, %s17, [#allocation3]
    $region5: #{tpu_custom_call.1} parent=1 // pred_fallthru
      _
    // Predicated region
    $region6: #{tpu_custom_call.1} parent=1 // pred_check
      _
    $region7: #{tpu_custom_call.1} parent=1 // pred_check_branch
      %21 = sbr.rel (0) target = $region9
    $region8: #{tpu_custom_call.1} parent=1 // pred_region
      %s23 = ssub.s32 4608, 4608
      %24 = vsyncadd [#allocation6], %s23
      %s25 = sshll.u32 [#allocation5], 4
      %s26 = int_to_ptr.vmem [resolvable:$true] %s25
      %31 = dma.hbm_to_vmem [thread:$0]  %s1, 4608, %s26, [#allocation6], 128, 128, 8
    $region9: #{tpu_custom_call.1} parent=1 // pred_fallthru
      _
    // Predicated region
    $region10: #{tpu_custom_call.1} parent=1 // pred_check
      _
    $region11: #{tpu_custom_call.1} parent=1 // pred_check_branch
      %33 = sbr.rel (0) target = $region13
    $region12: #{tpu_custom_call.1} parent=1 // pred_region
      %34 = dma.done [#allocation3], 128
    $region13: #{tpu_custom_call.1} parent=1 // pred_fallthru
      _
    // Predicated region
    $region14: #{tpu_custom_call.1} parent=1 // pred_check
      _
    $region15: #{tpu_custom_call.1} parent=1 // pred_check_branch
      %36 = sbr.rel (0) target = $region17
    $region16: #{tpu_custom_call.1} parent=1 // pred_region
      %37 = dma.done [#allocation6], 4608
    $region17: #{tpu_custom_call.1} parent=1 // pred_fallthru
      _
    %v38 = vld [vmem:[#allocation2] sm:$0xff]
    %v39 = vld [vmem:[#allocation5] sm:$0xff]
    %v40 = vld [vmem:[#allocation5 + $0x8] sm:$0x1]
    %v41 = vlaneseq
    %v42 = vshrl.u32 %v41, 7
    %v43 = vsub.s32 0, %v42
    %v44 = vrot.slane %v40, %v43
    %vm45 = vcmask 64512
    %v47 = vsel %vm45, %v38, 0
    %49 = vmatprep.subr.mxu0 0.0
    %50 = vmatpush1.msra.mxu0 %v39
    %51 = vmatprep.subr.mxu0 0.0
    %52 = vmatpush1.msra.mxu0 0.0
    %53 = vmatprep.subr.mxu0 0.0
    %54 = vmatpush1.msra.mxu0 0.0
    %55 = vmatprep.subr.mxu0 0.0
    %56 = vmatpush1.msra.mxu0 0.0
    %57 = vmatprep.subr.mxu0 0.0
    %58 = vmatpush1.msra.mxu0 0.0
    %59 = vmatprep.subr.mxu0 0.0
    %60 = vmatpush1.msra.mxu0 0.0
    %61 = vmatprep.subr.mxu0 0.0
    %62 = vmatpush1.msra.mxu0 0.0
    %63 = vmatprep.subr.mxu0 0.0
    %64 = vmatpush1.msra.mxu0 0.0
    %65 = vmatprep.subr.mxu0 0.0
    %66 = vmatpush1.msra.mxu0 0.0
    %67 = vmatprep.subr.mxu0 0.0
    %68 = vmatpush1.msra.mxu0 0.0
    %69 = vmatprep.subr.mxu0 0.0
    %70 = vmatpush1.msra.mxu0 0.0
    %71 = vmatprep.subr.mxu0 0.0
    %72 = vmatpush1.msra.mxu0 0.0
    %73 = vmatprep.subr.mxu0 0.0
    %74 = vmatpush1.msra.mxu0 0.0
    %75 = vmatprep.subr.mxu0 0.0
    %76 = vmatpush1.msra.mxu0 0.0
    %77 = vmatprep.subr.mxu0 0.0
    %78 = vmatpush1.msra.mxu0 0.0
    %79 = vmatprep.subr.mxu0 0.0
    %80 = vmatpush1.msra.mxu0 0.0
    %81 = vmatprep.subr.mxu0 0.0
    %82 = vmatpush1.msra.mxu0 0.0
    %83 = vmatprep.subr.mxu0 0.0
    %84 = vmatpush1.msra.mxu0 0.0
    %85 = vmatprep.subr.mxu0 0.0
    %86 = vmatpush1.msra.mxu0 0.0
    %87 = vmatprep.subr.mxu0 0.0
    %88 = vmatpush1.msra.mxu0 0.0
    %89 = vmatprep.subr.mxu0 0.0
    %90 = vmatpush1.msra.mxu0 0.0
    %91 = vmatprep.subr.mxu0 0.0
    %92 = vmatpush1.msra.mxu0 0.0
    %93 = vmatprep.subr.mxu0 0.0
    %94 = vmatpush1.msra.mxu0 0.0
    %95 = vmatprep.subr.mxu0 0.0
    %96 = vmatpush1.msra.mxu0 0.0
    %97 = vmatprep.subr.mxu0 0.0
    %98 = vmatpush1.msra.mxu0 0.0
    %99 = vmatprep.subr.mxu0 0.0
    %100 = vmatpush1.msra.mxu0 0.0
    %101 = vmatprep.subr.mxu0 0.0
    %102 = vmatpush1.msra.mxu0 0.0
    %103 = vmatprep.subr.mxu0 0.0
    %104 = vmatpush1.msra.mxu0 0.0
    %105 = vmatprep.subr.mxu0 0.0
    %106 = vmatpush1.msra.mxu0 0.0
    %107 = vmatprep.subr.mxu0 0.0
    %108 = vmatpush1.msra.mxu0 0.0
    %109 = vmatprep.subr.mxu0 0.0
    %110 = vmatpush1.msra.mxu0 0.0
    %111 = vmatprep.subr.mxu0 0.0
    %112 = vmatpush1.msra.mxu0 0.0
    %113 = vmatprep.mubr.f32.mxu0 0.0
    %114 = vmatmul.mubr.f32.gmra.mrb[0].mxu0 %v47
    %v115 = vpop.f32.mrb[0].mxu0
    %v116 = vadd.f32 %v44, %v115
    %v117 = vpop.f32.mrb[0].mxu0
    %118 = vdwg.mxu0
    %vm119 = vcmp.ge.f32.partialorder %v116, 0.0
    %v120 = vmul.f32 %v116, 0.01
    %v121 = vsel %vm119, %v116, %v120
    %v122 = vld [vmem:[#allocation5 + $0x10] sm:$0xff]
    %v123 = vld [vmem:[#allocation5 + $0x18] sm:$0xff]
    %v124 = vld [vmem:[#allocation5 + $0x20] sm:$0xff]
    %v125 = vld [vmem:[#allocation5 + $0x28] sm:$0xff]
    %v126 = vld [vmem:[#allocation5 + $0x30] sm:$0xff]
    %v127 = vld [vmem:[#allocation5 + $0x38] sm:$0xff]
    %v128 = vld [vmem:[#allocation5 + $0x40] sm:$0xff]
    %v129 = vld [vmem:[#allocation5 + $0x48] sm:$0xff]
    %v130 = vld [vmem:[#allocation5 + $0x50] sm:$0xff]
    %v131 = vld [vmem:[#allocation5 + $0x58] sm:$0xff]
    %v132 = vld [vmem:[#allocation5 + $0x60] sm:$0xff]
    %v133 = vld [vmem:[#allocation5 + $0x68] sm:$0xff]
    %v134 = vld [vmem:[#allocation5 + $0x70] sm:$0xff]
    %v135 = vld [vmem:[#allocation5 + $0x78] sm:$0xff]
    %v136 = vld [vmem:[#allocation5 + $0x80] sm:$0xff]
    %v137 = vld [vmem:[#allocation5 + $0x88] sm:$0xff]
    %v138 = vld [vmem:[#allocation5 + $0x90] sm:$0x1]
    %v139 = vlaneseq
    %v140 = vshrl.u32 %v139, 7
    %v141 = vsub.s32 0, %v140
    %v142 = vrot.slane %v138, %v141
    %143 = vmatprep.subr.mxu0 0.0
    %144 = vmatpush1.msra.mxu0 %v122
    %145 = vmatprep.subr.mxu0 0.0
    %146 = vmatpush1.msra.mxu0 %v123
    %147 = vmatprep.subr.mxu0 0.0
    %148 = vmatpush1.msra.mxu0 %v124
    %149 = vmatprep.subr.mxu0 0.0
    %150 = vmatpush1.msra.mxu0 %v125
    %151 = vmatprep.subr.mxu0 0.0
    %152 = vmatpush1.msra.mxu0 %v126
    %153 = vmatprep.subr.mxu0 0.0
    %154 = vmatpush1.msra.mxu0 %v127
    %155 = vmatprep.subr.mxu0 0.0
    %156 = vmatpush1.msra.mxu0 %v128
    %157 = vmatprep.subr.mxu0 0.0
    %158 = vmatpush1.msra.mxu0 %v129
    %159 = vmatprep.subr.mxu0 0.0
    %160 = vmatpush1.msra.mxu0 %v130
    %161 = vmatprep.subr.mxu0 0.0
    %162 = vmatpush1.msra.mxu0 %v131
    %163 = vmatprep.subr.mxu0 0.0
    %164 = vmatpush1.msra.mxu0 %v132
    %165 = vmatprep.subr.mxu0 0.0
    %166 = vmatpush1.msra.mxu0 %v133
    %167 = vmatprep.subr.mxu0 0.0
    %168 = vmatpush1.msra.mxu0 %v134
    %169 = vmatprep.subr.mxu0 0.0
    %170 = vmatpush1.msra.mxu0 %v135
    %171 = vmatprep.subr.mxu0 0.0
    %172 = vmatpush1.msra.mxu0 %v136
    %173 = vmatprep.subr.mxu0 0.0
    %174 = vmatpush1.msra.mxu0 %v137
    %175 = vmatprep.subr.mxu0 0.0
    %176 = vmatpush1.msra.mxu0 0.0
    %177 = vmatprep.subr.mxu0 0.0
    %178 = vmatpush1.msra.mxu0 0.0
    %179 = vmatprep.subr.mxu0 0.0
    %180 = vmatpush1.msra.mxu0 0.0
    %181 = vmatprep.subr.mxu0 0.0
    %182 = vmatpush1.msra.mxu0 0.0
    %183 = vmatprep.subr.mxu0 0.0
    %184 = vmatpush1.msra.mxu0 0.0
    %185 = vmatprep.subr.mxu0 0.0
    %186 = vmatpush1.msra.mxu0 0.0
    %187 = vmatprep.subr.mxu0 0.0
    %188 = vmatpush1.msra.mxu0 0.0
    %189 = vmatprep.subr.mxu0 0.0
    %190 = vmatpush1.msra.mxu0 0.0
    %191 = vmatprep.subr.mxu0 0.0
    %192 = vmatpush1.msra.mxu0 0.0
    %193 = vmatprep.subr.mxu0 0.0
    %194 = vmatpush1.msra.mxu0 0.0
    %195 = vmatprep.subr.mxu0 0.0
    %196 = vmatpush1.msra.mxu0 0.0
    %197 = vmatprep.subr.mxu0 0.0
    %198 = vmatpush1.msra.mxu0 0.0
    %199 = vmatprep.subr.mxu0 0.0
    %200 = vmatpush1.msra.mxu0 0.0
    %201 = vmatprep.subr.mxu0 0.0
    %202 = vmatpush1.msra.mxu0 0.0
    %203 = vmatprep.subr.mxu0 0.0
    %204 = vmatpush1.msra.mxu0 0.0
    %205 = vmatprep.subr.mxu0 0.0
    %206 = vmatpush1.msra.mxu0 0.0
    %207 = vmatprep.mubr.f32.mxu0 0.0
    %208 = vmatmul.mubr.f32.gmra.mrb[0].mxu0 %v121
    %v209 = vpop.f32.mrb[0].mxu0
    %v210 = vadd.f32 %v142, %v209
    %v211 = vpop.f32.mrb[0].mxu0
    %212 = vdwg.mxu0
    %vm213 = vcmp.ge.f32.partialorder %v210, 0.0
    %v214 = vmul.f32 %v210, 0.01
    %v215 = vsel %vm213, %v210, %v214
    %v216 = vld [vmem:[#allocation5 + $0x98] sm:$0xff]
    %v217 = vld [vmem:[#allocation5 + $0xa0] sm:$0xff]
    %v218 = vld [vmem:[#allocation5 + $0xa8] sm:$0xff]
    %v219 = vld [vmem:[#allocation5 + $0xb0] sm:$0xff]
    %v220 = vld [vmem:[#allocation5 + $0xb8] sm:$0xff]
    %v221 = vld [vmem:[#allocation5 + $0xc0] sm:$0xff]
    %v222 = vld [vmem:[#allocation5 + $0xc8] sm:$0xff]
    %v223 = vld [vmem:[#allocation5 + $0xd0] sm:$0xff]
    %v224 = vld [vmem:[#allocation5 + $0xd8] sm:$0xff]
    %v225 = vld [vmem:[#allocation5 + $0xe0] sm:$0xff]
    %v226 = vld [vmem:[#allocation5 + $0xe8] sm:$0xff]
    %v227 = vld [vmem:[#allocation5 + $0xf0] sm:$0xff]
    %v228 = vld [vmem:[#allocation5 + $0xf8] sm:$0xff]
    %v229 = vld [vmem:[#allocation5 + $0x100] sm:$0xff]
    %v230 = vld [vmem:[#allocation5 + $0x108] sm:$0xff]
    %v231 = vld [vmem:[#allocation5 + $0x110] sm:$0xff]
    %v232 = vld [vmem:[#allocation5 + $0x118] sm:$0x1]
    %v233 = vlaneseq
    %v234 = vshrl.u32 %v233, 7
    %v235 = vsub.s32 0, %v234
    %v236 = vrot.slane %v232, %v235
    %237 = vmatprep.subr.mxu0 0.0
    %238 = vmatpush1.msra.mxu0 %v216
    %239 = vmatprep.subr.mxu0 0.0
    %240 = vmatpush1.msra.mxu0 %v217
    %241 = vmatprep.subr.mxu0 0.0
    %242 = vmatpush1.msra.mxu0 %v218
    %243 = vmatprep.subr.mxu0 0.0
    %244 = vmatpush1.msra.mxu0 %v219
    %245 = vmatprep.subr.mxu0 0.0
    %246 = vmatpush1.msra.mxu0 %v220
    %247 = vmatprep.subr.mxu0 0.0
    %248 = vmatpush1.msra.mxu0 %v221
    %249 = vmatprep.subr.mxu0 0.0
    %250 = vmatpush1.msra.mxu0 %v222
    %251 = vmatprep.subr.mxu0 0.0
    %252 = vmatpush1.msra.mxu0 %v223
    %253 = vmatprep.subr.mxu0 0.0
    %254 = vmatpush1.msra.mxu0 %v224
    %255 = vmatprep.subr.mxu0 0.0
    %256 = vmatpush1.msra.mxu0 %v225
    %257 = vmatprep.subr.mxu0 0.0
    %258 = vmatpush1.msra.mxu0 %v226
    %259 = vmatprep.subr.mxu0 0.0
    %260 = vmatpush1.msra.mxu0 %v227
    %261 = vmatprep.subr.mxu0 0.0
    %262 = vmatpush1.msra.mxu0 %v228
    %263 = vmatprep.subr.mxu0 0.0
    %264 = vmatpush1.msra.mxu0 %v229
    %265 = vmatprep.subr.mxu0 0.0
    %266 = vmatpush1.msra.mxu0 %v230
    %267 = vmatprep.subr.mxu0 0.0
    %268 = vmatpush1.msra.mxu0 %v231
    %269 = vmatprep.subr.mxu0 0.0
    %270 = vmatpush1.msra.mxu0 0.0
    %271 = vmatprep.subr.mxu0 0.0
    %272 = vmatpush1.msra.mxu0 0.0
    %273 = vmatprep.subr.mxu0 0.0
    %274 = vmatpush1.msra.mxu0 0.0
    %275 = vmatprep.subr.mxu0 0.0
    %276 = vmatpush1.msra.mxu0 0.0
    %277 = vmatprep.subr.mxu0 0.0
    %278 = vmatpush1.msra.mxu0 0.0
    %279 = vmatprep.subr.mxu0 0.0
    %280 = vmatpush1.msra.mxu0 0.0
    %281 = vmatprep.subr.mxu0 0.0
    %282 = vmatpush1.msra.mxu0 0.0
    %283 = vmatprep.subr.mxu0 0.0
    %284 = vmatpush1.msra.mxu0 0.0
    %285 = vmatprep.subr.mxu0 0.0
    %286 = vmatpush1.msra.mxu0 0.0
    %287 = vmatprep.subr.mxu0 0.0
    %288 = vmatpush1.msra.mxu0 0.0
    %289 = vmatprep.subr.mxu0 0.0
    %290 = vmatpush1.msra.mxu0 0.0
    %291 = vmatprep.subr.mxu0 0.0
    %292 = vmatpush1.msra.mxu0 0.0
    %293 = vmatprep.subr.mxu0 0.0
    %294 = vmatpush1.msra.mxu0 0.0
    %295 = vmatprep.subr.mxu0 0.0
    %296 = vmatpush1.msra.mxu0 0.0
    %297 = vmatprep.subr.mxu0 0.0
    %298 = vmatpush1.msra.mxu0 0.0
    %299 = vmatprep.subr.mxu0 0.0
    %300 = vmatpush1.msra.mxu0 0.0
    %301 = vmatprep.mubr.f32.mxu0 0.0
    %302 = vmatmul.mubr.f32.gmra.mrb[0].mxu0 %v215
    %v303 = vpop.f32.mrb[0].mxu0
    %v304 = vadd.f32 %v236, %v303
    %v305 = vpop.f32.mrb[0].mxu0
    %306 = vdwg.mxu0
    %v307 = vtanh.pop %v304
    %v308 = vmul.f32 %v307, 2.0
    %309 = vst [vmem:[#allocation7] sm:$0xff] %v308
    // Predicated region
    $region18: #{tpu_custom_call.1} parent=1 // pred_check
      _
    $region19: #{tpu_custom_call.1} parent=1 // pred_check_branch
      %311 = sbr.rel (0) target = $region21
    $region20: #{tpu_custom_call.1} parent=1 // pred_region
      %s313 = ssub.s32 128, 128
      %314 = vsyncadd [#allocation4], %s313
      %s316 = sshll.u32 [#allocation7], 4
      %s317 = int_to_ptr.vmem [resolvable:$true] %s316
      %319 = dma.vmem_to_hbm [thread:$0]  %s317, 128, %s2, [#allocation4]
    $region21: #{tpu_custom_call.1} parent=1 // pred_fallthru
      _
    // Predicated region
    $region22: #{tpu_custom_call.1} parent=1 // pred_check
      _
    $region23: #{tpu_custom_call.1} parent=1 // pred_check_branch
      %321 = sbr.rel (0) target = $region25
    $region24: #{tpu_custom_call.1} parent=1 // pred_region
      %322 = dma.done [#allocation4], 128
    $region25: #{tpu_custom_call.1} parent=1 // pred_fallthru
      _
    %323 = vsyncpa [#allocation3], 1
    %324 = vsyncpa [#allocation6], 1
    %325 = vsyncpa [#allocation4], 1

</llo_original>
